<compile_context>
chip_gen: v7x
topology: tpu7x:2x2x1
jax: 0.10.0
libtpu: 0.0.40
codegen_flags: <defaults>
</compile_context>

<pallas_src>
import functools

import jax
import jax.numpy as jnp
from jax.experimental import pallas as pl
from jax.experimental.pallas import tpu as pltpu


# ----------------------------- shared SE math --------------------------------

def _se_apply(x, w1_col, w2_col):
    """SE core on a (Ck, Sk) slab with column-oriented folded weights.

    w1_col: (C_red, Ck) — folds the 1/S mean and row->channel aggregation.
    w2_col: (Ck, C_red) — folds the channel->row broadcast (sigmoid commutes
            with row duplication).
    The gate stays (Ck, 1), so the final multiply broadcasts along lanes (a
    per-row splat) and no (Ck, Sk) gate intermediate is materialized.
    """
    sums = jnp.sum(x, axis=-1, keepdims=True, dtype=jnp.float32)       # (Ck, 1)
    h = jnp.dot(w1_col, sums, preferred_element_type=jnp.float32)      # (C_red, 1)
    h = jnp.where(h >= 0, h, 0.01 * h)                                 # LeakyReLU
    z = jnp.dot(w2_col, h, preferred_element_type=jnp.float32)         # (Ck, 1)
    s = jax.nn.sigmoid(z)                                              # EUP slot
    return x * s.astype(x.dtype)


# ----------------------------- kernels ----------------------------------------

def _se_fused_kernel(x_ref, w1_ref, w2_ref, o_ref):
    # Auto-pipelined fused path: one whole (Ck, Sk) slab per batch element.
    o_ref[...] = _se_apply(x_ref[...], w1_ref[...], w2_ref[...])


def _se_fused_manual_kernel(x_hbm, w1_ref, w2_ref, o_hbm, buf, sem):
    # Low-VMEM fused path (v7x tier): whole-slab manual DMA in, scale in
    # place, DMA back out to the (aliased) output.  Serializing in/out DMAs on
    # a single slab buffer costs ~nothing at the HBM roofline (in + out bytes
    # are the bound either way) while cutting VMEM from 4x to ~1-2x slab.
    n = pl.program_id(0)
    cp_in = pltpu.make_async_copy(x_hbm.at[n], buf, sem)
    cp_in.start()
    cp_in.wait()
    buf[...] = _se_apply(buf[...], w1_ref[...], w2_ref[...])
    cp_out = pltpu.make_async_copy(buf, o_hbm.at[n], sem)
    cp_out.start()
    cp_out.wait()


def _se_pool_kernel(x_ref, sum_ref, *, total_s=None):
    # Per-row f32 partial sums; the output block is resident across the
    # (arbitrary) S grid axis.  `total_s` is set only when the last S tile is
    # ragged: out-of-range lanes are masked to zero (zeros do not change the
    # pooled sum; the true 1/S is folded into the effective weights).
    si = pl.program_id(1)

    @pl.when(si == 0)
    def _():
        sum_ref[...] = jnp.zeros_like(sum_ref)

    x = x_ref[...]
    if total_s is not None:
        tile_s = x.shape[-1]
        col = si * tile_s + jax.lax.broadcasted_iota(jnp.int32, x.shape, x.ndim - 1)
        x = jnp.where(col < total_s, x, jnp.zeros_like(x))
    sum_ref[...] += jnp.sum(x, axis=-1, keepdims=True, dtype=jnp.float32)


def _se_scale_kernel(x_ref, s_ref, o_ref):
    # Broadcast-scale one lane-dense (Ck, tS) tile in the input dtype.
    # (Out-of-range writes of a ragged last tile are masked by Pallas.)
    o_ref[...] = x_ref[...] * s_ref[...].astype(o_ref.dtype)


# ----------------------------- wrapper helpers --------------------------------

def _tpu_vmem_and_gen():
    """(vmem_capacity_bytes, is_multi_tensorcore_chip) with safe fallbacks."""
    kind = ""
    try:
        kind = jax.devices()[0].device_kind.lower()
    except Exception:
        pass
    is_v7 = ("v7" in kind) or ("7x" in kind)
    cap = None
    try:
        cap = int(pltpu.get_tpu_info().vmem_capacity_bytes)
    except Exception:
        cap = None
    if cap is None or cap <= 0:
        if is_v7:
            cap = 64 << 20
        elif "v2" in kind:
            cap = 16 << 20
        elif "v3" in kind:
            cap = 32 << 20
        elif any(g in kind for g in ("v4", "v5", "v6")):
            cap = 128 << 20
        else:
            cap = 64 << 20          # unknown generation: be conservative
    return cap, is_v7


def _choose_packing(C, S, min_sub):
    """Pick k | S so the (N, C*k, S//k) slab is sublane- and lane-dense."""
    if C >= min_sub:
        return 1
    k_min = -(-min_sub // C)                        # ceil(min_sub / C)
    best_k, best_score = 1, -1
    k_cap = max(k_min, min(S, 64 * k_min))
    for k in range(k_min, k_cap + 1):
        if S % k:
            continue
        Ck, Sk = C * k, S // k
        score = 0
        if Sk % 128 == 0:                           # lane-dense (no vst.msk)
            score += 2
        if Ck % min_sub == 0:                       # full sublanes
            score += 1
        if score > best_score:                      # smallest k wins a tie
            best_score, best_k = score, k
        if score == 3:
            break
    return best_k


def _choose_s_tile(Ck, Sk, itemsize, target_bytes):
    """Largest 128-multiple tile <= target that divides Sk; else ragged tile."""
    max_t = max(128, (target_bytes // max(1, Ck * itemsize)) // 128 * 128)
    if Sk <= max_t:
        return Sk
    t = max_t
    while t >= 128:
        if Sk % t == 0:
            return t                                # dividing, lane-dense
        t -= 128
    return max_t                                    # ragged last tile (masked)


# ----------------------------- wrapper -----------------------------------------

def se_layer(x, w1, w2, *, force_two_pass=False, force_manual_fused=False,
             two_pass_tile=None):
    """SELayer forward.  x: (N, C, T, H, W); w1: (C_red, C); w2: (C, C_red).

    `two_pass_tile`, if given, must be a multiple of 128 (or >= S tile span).
    """
    N, C, T, H, W = x.shape
    S = T * H * W
    dtype = x.dtype
    itemsize = jnp.dtype(dtype).itemsize

    vmem_cap, is_v7 = _tpu_vmem_and_gen()

    # --- sublane/lane density packing: (N, C, S) -> (N, C*k, S/k).
    min_sub = max(1, 32 // (itemsize * 8)) * 8       # 8 f32 / 16 bf16 / 32 int8
    k = _choose_packing(C, S, min_sub)
    Ck, Sk = C * k, S // k

    # --- fold 1/S mean + row<->channel mappings into column-oriented weights
    #     (done once in XLA; no in-kernel transpose/reshape/repeat).
    w1f = w1.astype(jnp.float32)                     # (C_red, C)
    w2f = w2.astype(jnp.float32)                     # (C, C_red)
    row_to_ch = jnp.repeat(jnp.eye(C, dtype=jnp.float32), k, axis=0)   # (Ck, C)
    w1_col = (w1f @ row_to_ch.T) / float(S)          # (C_red, Ck)
    w2_col = row_to_ch @ w2f                         # (Ck, C_red)

    x3 = x.reshape(N, Ck, Sk)
    block_bytes = Ck * Sk * itemsize
    w_bytes = 4 * (w1_col.size + w2_col.size)

    # --- generation-aware VMEM budgeting.
    budget = (vmem_cap * 3) // 4                     # ~96 MiB v5e/v6e, ~48 MiB v7x
    vmem_ceiling = (vmem_cap * 7) // 8               # stays below physical VMEM
    auto_need = 4 * block_bytes + 2 * w_bytes + (2 << 20)      # 2-in + 2-out bufs
    manual_need = int(2.25 * block_bytes) + w_bytes + (2 << 20)

    # On a 2-TensorCore chip (v7x) a single-batch fused pass pins all traffic
    # to one core; the tiled two-pass path keeps both cores busy instead.
    prefer_two_pass = is_v7 and N == 1 and block_bytes > (8 << 20)

    if force_two_pass:
        path = "two_pass"
    elif force_manual_fused:
        path = "manual"
    elif prefer_two_pass:
        path = "two_pass"
    elif auto_need <= budget:
        path = "auto"
    elif manual_need <= budget:
        path = "manual"
    else:
        path = "two_pass"

    fused_cost = pl.CostEstimate(
        flops=2 * N * Ck * Sk, transcendentals=N * Ck,
        bytes_accessed=2 * N * Ck * Sk * itemsize)

    if path == "auto":
        out3 = pl.pallas_call(
            _se_fused_kernel,
            out_shape=jax.ShapeDtypeStruct((N, Ck, Sk), dtype),
            grid_spec=pltpu.PrefetchScalarGridSpec(
                num_scalar_prefetch=0,
                grid=(N,),
                in_specs=[
                    pl.BlockSpec((None, Ck, Sk), lambda n: (n, 0, 0)),
                    pl.BlockSpec(w1_col.shape, lambda n: (0, 0)),
                    pl.BlockSpec(w2_col.shape, lambda n: (0, 0)),
                ],
                out_specs=pl.BlockSpec((None, Ck, Sk), lambda n: (n, 0, 0)),
            ),
            input_output_aliases={0: 0},
            cost_estimate=fused_cost,
            compiler_params=pltpu.CompilerParams(
                dimension_semantics=("parallel",),
                vmem_limit_bytes=int(min(vmem_ceiling,
                                         max(32 << 20, auto_need + (2 << 20))))),
        )(x3, w1_col, w2_col)
        return out3.reshape(N, C, T, H, W)

    if path == "manual":
        out3 = pl.pallas_call(
            _se_fused_manual_kernel,
            out_shape=jax.ShapeDtypeStruct((N, Ck, Sk), dtype),
            grid_spec=pltpu.PrefetchScalarGridSpec(
                num_scalar_prefetch=0,
                grid=(N,),
                in_specs=[
                    pl.BlockSpec(memory_space=pl.ANY),
                    pl.BlockSpec(w1_col.shape, lambda n: (0, 0)),
                    pl.BlockSpec(w2_col.shape, lambda n: (0, 0)),
                ],
                out_specs=pl.BlockSpec(memory_space=pl.ANY),
                scratch_shapes=[
                    pltpu.VMEM((Ck, Sk), dtype),
                    pltpu.SemaphoreType.DMA,
                ],
            ),
            input_output_aliases={0: 0},
            cost_estimate=fused_cost,
            compiler_params=pltpu.CompilerParams(
                dimension_semantics=("parallel",),
                vmem_limit_bytes=int(min(vmem_ceiling,
                                         max(32 << 20, manual_need + (2 << 20))))),
        )(x3, w1_col, w2_col)
        return out3.reshape(N, C, T, H, W)

    # ------------------- two-pass fallback (no pad / no slice) -----------------
    target_tile = (12 << 20) if vmem_cap >= (96 << 20) else (5 << 20)
    tS = int(two_pass_tile) if two_pass_tile is not None else \
        _choose_s_tile(Ck, Sk, itemsize, target_tile)
    tS = max(1, min(tS, Sk))
    nS = pl.cdiv(Sk, tS)
    ragged = (Sk % tS) != 0
    tile_bytes = Ck * tS * itemsize
    tp_limit = int(min(vmem_ceiling, max(32 << 20, 5 * tile_bytes + (4 << 20))))

    # Pass 1: tiled pooled sums -> (N, Ck, 1) in f32.
    pool_kernel = functools.partial(_se_pool_kernel,
                                    total_s=Sk if ragged else None)
    sums = pl.pallas_call(
        pool_kernel,
        out_shape=jax.ShapeDtypeStruct((N, Ck, 1), jnp.float32),
        grid_spec=pltpu.PrefetchScalarGridSpec(
            num_scalar_prefetch=0,
            grid=(N, nS),
            in_specs=[pl.BlockSpec((None, Ck, tS), lambda n, si: (n, 0, si))],
            out_specs=pl.BlockSpec((None, Ck, 1), lambda n, si: (n, 0, 0)),
        ),
        cost_estimate=pl.CostEstimate(
            flops=N * Ck * Sk, transcendentals=0,
            bytes_accessed=N * Ck * Sk * itemsize),
        compiler_params=pltpu.CompilerParams(
            dimension_semantics=("parallel", "arbitrary"),
            vmem_limit_bytes=tp_limit),
    )(x3)

    # Tiny FCs + sigmoid in plain XLA (noise next to the HBM roofline).
    y = sums[:, :, 0]                                 # (N, Ck) per-row sums
    h = y @ w1_col.T                                  # mean + aggregation folded
    h = jnp.where(h >= 0, h, 0.01 * h)
    s = jax.nn.sigmoid(h @ w2_col.T)                  # (N, Ck)
    s = s[:, :, None].astype(dtype)                   # (N, Ck, 1)

    # Pass 2: tiled broadcast-scale (aliases x's real buffer: no padded copy).
    out3 = pl.pallas_call(
        _se_scale_kernel,
        out_shape=jax.ShapeDtypeStruct((N, Ck, Sk), dtype),
        grid_spec=pltpu.PrefetchScalarGridSpec(
            num_scalar_prefetch=0,
            grid=(N, nS),
            in_specs=[pl.BlockSpec((None, Ck, tS), lambda n, si: (n, 0, si)),
                      pl.BlockSpec((None, Ck, 1), lambda n, si: (n, 0, 0))],
            out_specs=pl.BlockSpec((None, Ck, tS), lambda n, si: (n, 0, si)),
        ),
        input_output_aliases={0: 0},
        cost_estimate=pl.CostEstimate(
            flops=N * Ck * Sk, transcendentals=0,
            bytes_accessed=2 * N * Ck * Sk * itemsize),
        compiler_params=pltpu.CompilerParams(
            dimension_semantics=("parallel", "parallel"),
            vmem_limit_bytes=tp_limit),
    )(x3, s)
    return out3.reshape(N, C, T, H, W)


def se_layer_ref(x, w1, w2):
    """Pure-JAX reference mirroring the PyTorch module."""
    y = jnp.mean(x.astype(jnp.float32), axis=(2, 3, 4))            # (N, C)
    h = y @ w1.astype(jnp.float32).T
    h = jnp.where(h >= 0, h, 0.01 * h)
    z = h @ w2.astype(jnp.float32).T
    s = jax.nn.sigmoid(z)
    return (x.astype(jnp.float32) * s[:, :, None, None, None]).astype(x.dtype)


if __name__ == "__main__":
    # Small shapes consistent with the module's forward (5D NCDHW input).
    N, C, T, H, W = 2, 4, 8, 16, 16
    reduction = 1
    C_red = C // reduction

    key = jax.random.PRNGKey(0)
    kx, k1, k2 = jax.random.split(key, 3)

    x = jax.random.normal(kx, (N, C, T, H, W), dtype=jnp.float32)
    # Deterministic synthetic weights (nn.Linear(..., bias=False) style init).
    bound1 = 1.0 / (C ** 0.5)
    bound2 = 1.0 / (C_red ** 0.5)
    w1 = jax.random.uniform(k1, (C_red, C), jnp.float32, -bound1, bound1)
    w2 = jax.random.uniform(k2, (C, C_red), jnp.float32, -bound2, bound2)

    fn = jax.jit(se_layer, static_argnames=("force_two_pass",
                                            "force_manual_fused",
                                            "two_pass_tile"))
    ref = se_layer_ref(x, w1, w2)

    # 1) Fused, auto-pipelined single-pass path (default).
    out = jax.block_until_ready(fn(x, w1, w2))
    assert out.shape == x.shape
    assert jnp.allclose(out, ref, atol=1e-5, rtol=1e-5), "fused(auto) mismatch"

    # 2) Low-VMEM manual-DMA fused path (v7x tier).
    out_m = jax.block_until_ready(fn(x, w1, w2, force_manual_fused=True))
    assert jnp.allclose(out_m, ref, atol=1e-5, rtol=1e-5), "fused(manual) mismatch"

    # 3) Tiled two-pass fallback with a ragged last S tile (mask path, no pad).
    out_t = jax.block_until_ready(fn(x, w1, w2, force_two_pass=True,
                                     two_pass_tile=384))
    assert jnp.allclose(out_t, ref, atol=1e-5, rtol=1e-5), "two-pass mismatch"

    # 4) bf16 input exercises the 16-sublane packing (k=4, Ck=16, Sk=512).
    xb = x.astype(jnp.bfloat16)
    refb = se_layer_ref(xb, w1, w2)
    outb = jax.block_until_ready(fn(xb, w1, w2))
    assert outb.dtype == jnp.bfloat16
    assert jnp.allclose(outb.astype(jnp.float32), refb.astype(jnp.float32),
                        atol=6e-2, rtol=6e-2), "bf16 fused mismatch"

    print("KERNEL_OK")
</pallas_src>

<mosaic_0001>
module attributes {stable_mosaic.version = 11 : i64} {
  func.func @_se_fused_kernel(%arg0: i32, %arg1: memref<1x8x1024xf32, #tpu.memory_space<vmem>>, %arg2: memref<4x8xf32, #tpu.memory_space<vmem>>, %arg3: memref<8x4xf32, #tpu.memory_space<vmem>>, %arg4: memref<1x8x1024xf32, #tpu.memory_space<vmem>>) attributes {dimension_semantics = [#tpu.dimension_semantics<parallel>], iteration_bounds = array<i64: 2>, scalar_prefetch = 0 : i64, scratch_operands = 0 : i64, tpu.core_type = #tpu.core_type<tc>, window_params = [{transform_indices = @transform_0, window_bounds = array<i64: 1, 8, 1024>}, {pipeline_mode = #tpu.pipeline_mode<synchronous>, transform_indices = @transform_1, window_bounds = array<i64: 4, 8>}, {pipeline_mode = #tpu.pipeline_mode<synchronous>, transform_indices = @transform_2, window_bounds = array<i64: 8, 4>}, {transform_indices = @transform_3, window_bounds = array<i64: 1, 8, 1024>}]} {
    %c0 = arith.constant 0 : index
    %c0_0 = arith.constant 0 : index
    %c0_1 = arith.constant 0 : index
    %0 = vector.load %arg1[%c0, %c0_0, %c0_1] : memref<1x8x1024xf32, #tpu.memory_space<vmem>>, vector<1x8x1024xf32>
    %1 = vector.shape_cast %0 : vector<1x8x1024xf32> to vector<8x1024xf32>
    %c0_2 = arith.constant 0 : index
    %c0_3 = arith.constant 0 : index
    %2 = vector.load %arg2[%c0_2, %c0_3] : memref<4x8xf32, #tpu.memory_space<vmem>>, vector<4x8xf32>
    %c0_4 = arith.constant 0 : index
    %c0_5 = arith.constant 0 : index
    %3 = vector.load %arg3[%c0_4, %c0_5] : memref<8x4xf32, #tpu.memory_space<vmem>>, vector<8x4xf32>
    %cst = arith.constant dense<0.000000e+00> : vector<8xf32>
    %4 = vector.multi_reduction <add>, %1, %cst [1] : vector<8x1024xf32> to vector<8xf32>
    %5 = vector.shape_cast %4 : vector<8xf32> to vector<8x1xf32>
    %cst_6 = arith.constant dense<0.000000e+00> : vector<4x1xf32>
    %6 = tpu.matmul %2, %5, %cst_6 {dimension_numbers = #tpu.dot_dimension_numbers<[1], [0], [0], [1], [0, 0, 1, 1], [], []>} : vector<4x8xf32>, vector<8x1xf32>, vector<4x1xf32> -> vector<4x1xf32>
    %cst_7 = arith.constant 0.000000e+00 : f32
    %7 = vector.broadcast %cst_7 : f32 to vector<4x1xf32>
    %8 = arith.cmpf oge, %6, %7 : vector<4x1xf32>
    %cst_8 = arith.constant 0.00999999977 : f32
    %9 = vector.broadcast %cst_8 : f32 to vector<4x1xf32>
    %10 = arith.mulf %9, %6 : vector<4x1xf32>
    %11 = arith.select %8, %6, %10 : vector<4x1xi1>, vector<4x1xf32>
    %cst_9 = arith.constant dense<0.000000e+00> : vector<8x1xf32>
    %12 = tpu.matmul %3, %11, %cst_9 {dimension_numbers = #tpu.dot_dimension_numbers<[1], [0], [0], [1], [0, 0, 1, 1], [], []>} : vector<8x4xf32>, vector<4x1xf32>, vector<8x1xf32> -> vector<8x1xf32>
    %13 = arith.negf %12 : vector<8x1xf32>
    %14 = math.exp %13 : vector<8x1xf32>
    %cst_10 = arith.constant 1.000000e+00 : f32
    %15 = vector.broadcast %cst_10 : f32 to vector<8x1xf32>
    %16 = arith.addf %15, %14 : vector<8x1xf32>
    %17 = arith.divf %15, %16 : vector<8x1xf32>
    %18 = vector.broadcast %17 : vector<8x1xf32> to vector<8x1024xf32>
    %19 = arith.mulf %1, %18 : vector<8x1024xf32>
    %c0_11 = arith.constant 0 : index
    %c0_12 = arith.constant 0 : index
    %c0_13 = arith.constant 0 : index
    %20 = vector.load %arg4[%c0_11, %c0_12, %c0_13] : memref<1x8x1024xf32, #tpu.memory_space<vmem>>, vector<1x8x1024xf32>
    %21 = vector.shape_cast %20 : vector<1x8x1024xf32> to vector<8x1024xf32>
    %22 = vector.shape_cast %19 : vector<8x1024xf32> to vector<1x8x1024xf32>
    tpu.vector_store %arg4[%c0_11, %c0_12, %c0_13], %22 {strides = array<i32>} : memref<1x8x1024xf32, #tpu.memory_space<vmem>>, vector<1x8x1024xf32>,
    return
  }
  func.func @transform_0(%arg0: i32) -> (i32, i32, i32) {
    %c0_i32 = arith.constant 0 : i32
    %c0_i32_0 = arith.constant 0 : i32
    %c0_i32_1 = arith.constant 0 : i32
    return %arg0, %c0_i32, %c0_i32_0 : i32, i32, i32
  }
  func.func @transform_1(%arg0: i32) -> (i32, i32) {
    %c0_i32 = arith.constant 0 : i32
    %c0_i32_0 = arith.constant 0 : i32
    %c0_i32_1 = arith.constant 0 : i32
    return %c0_i32, %c0_i32_0 : i32, i32
  }
  func.func @transform_2(%arg0: i32) -> (i32, i32) {
    %c0_i32 = arith.constant 0 : i32
    %c0_i32_0 = arith.constant 0 : i32
    %c0_i32_1 = arith.constant 0 : i32
    return %c0_i32, %c0_i32_0 : i32, i32
  }
  func.func @transform_3(%arg0: i32) -> (i32, i32, i32) {
    %c0_i32 = arith.constant 0 : i32
    %c0_i32_0 = arith.constant 0 : i32
    %c0_i32_1 = arith.constant 0 : i32
    return %arg0, %c0_i32, %c0_i32_0 : i32, i32, i32
  }
}

</mosaic_0001>

<llo_original>
// kernel: se_layer.1
$region0: #{se_layer.1}
  #allocation0 [shape = 'u32[]', space=smem, size = 0x4, offset = 0x4, fixed_abs, tag = 'smem constant byte address 0x4 - core index']
  #allocation1 [shape = 'u32[144,128]{1,0:T(1,128)}', space=vmem, size = 0x12000, scoped, tag = 'internal scratch']
  %s0 = inlined_call_operand.vmem [shape: f32[2,8,1024], index: 0, kind: input, shape index: {}, may-alias: {0,3}]
  %s1 = inlined_call_operand.vmem [shape: f32[4,8], index: 1, kind: input, shape index: {}]
  %s2 = inlined_call_operand.vmem [shape: f32[8,4], index: 2, kind: input, shape index: {}]
  %s3 = inlined_call_operand.vmem [shape: f32[2,8,1024], index: 3, kind: output, shape index: {}, may-alias: {0,3}]
  %s4 = sld [smem:[#allocation0]]
  $region45: #{se_layer.1} parent=0
    _
  %s6 = ssub.s32 1, %s4
  %s7 = scalar_select 0, %s6, %s4
  loop: start=0, step=1, limit=4
  $region2: #{se_layer.1} parent=0 // loop_pre_header
    _
  $region3: #{se_layer.1} parent=0 // loop_header
    %s9 = sphi 0, %s13
    %p10 = scmp.ge.s32.totalorder %s9, 4
    %s19 = sphi 0, %s21
    %s22 = sphi 0, %s19
    %s23 = sphi 0, %s22
    %s39 = sphi 0, %s23
    %s43 = sphi 0, %s43
    %s45 = sphi 0, %s43
    %s46 = sphi 0, %s45
    %s60 = sphi 0, %s46
    %s64 = sphi 0, %s64
    %s66 = sphi 0, %s64
    %s67 = sphi 0, %s66
    %s81 = sphi 0, %s67
    %s87 = sphi 0, %s89
    %s90 = sphi 0, %s87
    %s91 = sphi 0, %s90
    %s107 = sphi 0, %s91
  $region4: #{se_layer.1} parent=0 // loop_header_branch
    %12 = sbr.rel (%p10) target = $region8
  $region5: #{se_layer.1} parent=0 // loop_body
    %s14 = ssub.s32 %s9, 1
    %s15 = ssub.s32 %s9, 2
    %s16 = sadd.s32 %s9, 1
    %s17 = ssub.s32 %s9, %s16
    %p18 = scmp.eq.s32.totalorder %s17, 0
    %s20 = sadd.s32 %s19, 1
    %s21 = scalar_select %p18, %s19, %s20
    %p24 = pneg %p18
    %p25 = scmp.eq.s32.totalorder %s9, 1
    %p26 = por %p24, %p25
    %p27 = scmp.ne.s32.totalorder %s19, %s22
    %p28 = scmp.eq.s32.totalorder %s9, 0
    %p29 = por %p27, %p28
    %p30 = scmp.ne.s32.totalorder %s19, %s22
    %p31 = scmp.eq.s32.totalorder %s14, 1
    %p32 = por %p30, %p31
    %p33 = scmp.ne.s32.totalorder %s22, %s23
    %p34 = scmp.eq.s32.totalorder %s14, 0
    %p35 = por %p33, %p34
    %p36 = scmp.ne.s32.totalorder %s22, %s23
    %p37 = scmp.eq.s32.totalorder %s15, 1
    %p38 = por %p36, %p37
    %p40 = scmp.ne.s32.totalorder %s23, %s39
    %p41 = scmp.eq.s32.totalorder %s15, 0
    %p42 = por %p40, %p41
    %s44 = sadd.s32 %s43, 1
    %p47 = scmp.eq.s32.totalorder %s9, 1
    %p48 = scmp.ne.s32.totalorder %s43, %s45
    %p49 = scmp.eq.s32.totalorder %s9, 0
    %p50 = por %p48, %p49
    %p51 = scmp.ne.s32.totalorder %s43, %s45
    %p52 = scmp.eq.s32.totalorder %s14, 1
    %p53 = por %p51, %p52
    %p54 = scmp.ne.s32.totalorder %s45, %s46
    %p55 = scmp.eq.s32.totalorder %s14, 0
    %p56 = por %p54, %p55
    %p57 = scmp.ne.s32.totalorder %s45, %s46
    %p58 = scmp.eq.s32.totalorder %s15, 1
    %p59 = por %p57, %p58
    %p61 = scmp.ne.s32.totalorder %s46, %s60
    %p62 = scmp.eq.s32.totalorder %s15, 0
    %p63 = por %p61, %p62
    %s65 = sadd.s32 %s64, 1
    %p68 = scmp.eq.s32.totalorder %s9, 1
    %p69 = scmp.ne.s32.totalorder %s64, %s66
    %p70 = scmp.eq.s32.totalorder %s9, 0
    %p71 = por %p69, %p70
    %p72 = scmp.ne.s32.totalorder %s64, %s66
    %p73 = scmp.eq.s32.totalorder %s14, 1
    %p74 = por %p72, %p73
    %p75 = scmp.ne.s32.totalorder %s66, %s67
    %p76 = scmp.eq.s32.totalorder %s14, 0
    %p77 = por %p75, %p76
    %p78 = scmp.ne.s32.totalorder %s66, %s67
    %p79 = scmp.eq.s32.totalorder %s15, 1
    %p80 = por %p78, %p79
    %p82 = scmp.ne.s32.totalorder %s67, %s81
    %p83 = scmp.eq.s32.totalorder %s15, 0
    %p84 = por %p82, %p83
    %s85 = ssub.s32 %s9, %s16
    %p86 = scmp.eq.s32.totalorder %s85, 0
    %s88 = sadd.s32 %s87, 1
    %s89 = scalar_select %p86, %s87, %s88
    %p92 = pneg %p86
    %p93 = scmp.eq.s32.totalorder %s9, 1
    %p94 = por %p92, %p93
    %p95 = scmp.ne.s32.totalorder %s87, %s90
    %p96 = scmp.eq.s32.totalorder %s9, 0
    %p97 = por %p95, %p96
    %p98 = scmp.ne.s32.totalorder %s87, %s90
    %p99 = scmp.eq.s32.totalorder %s14, 1
    %p100 = por %p98, %p99
    %p101 = scmp.ne.s32.totalorder %s90, %s91
    %p102 = scmp.eq.s32.totalorder %s14, 0
    %p103 = por %p101, %p102
    %p104 = scmp.ne.s32.totalorder %s90, %s91
    %p105 = scmp.eq.s32.totalorder %s15, 1
    %p106 = por %p104, %p105
    %p108 = scmp.ne.s32.totalorder %s91, %s107
    %p109 = scmp.eq.s32.totalorder %s15, 0
    %p110 = por %p108, %p109
    %p111 = scmp.le.s32.totalorder 1, %s9
    %p112 = scmp.lt.s32.totalorder %s9, 3
    %p113 = pnand %p111, %p112
    %p114 = pneg %p113
    // Predicated region
    $region9: #{se_layer.1} parent=5 // pred_check
      _
    $region10: #{se_layer.1} parent=5 // pred_check_branch
      %116 = sbr.rel (%p113) target = $region12
    $region11: #{se_layer.1} parent=5 // pred_region
      %s117 = ssub.s32 %s9, 1
      // Predicated region
      $region13: #{se_layer.1} parent=11 // pred_check
        %p118 = pneg %p56
      $region14: #{se_layer.1} parent=11 // pred_check_branch
        %120 = sbr.rel (%p118) target = $region16
      $region15: #{se_layer.1} parent=11 // pred_region
        _
      $region16: #{se_layer.1} parent=11 // pred_fallthru
        _
      // Predicated region
      $region17: #{se_layer.1} parent=11 // pred_check
        %p121 = pneg %p77
      $region18: #{se_layer.1} parent=11 // pred_check_branch
        %123 = sbr.rel (%p121) target = $region20
      $region19: #{se_layer.1} parent=11 // pred_region
        _
      $region20: #{se_layer.1} parent=11 // pred_fallthru
        _
    $region12: #{se_layer.1} parent=5 // pred_fallthru
      _
    %p124 = scmp.lt.s32.totalorder %s9, 2
    // Predicated region
    $region21: #{se_layer.1} parent=5 // pred_check
      %p125 = pneg %p124
    $region22: #{se_layer.1} parent=5 // pred_check_branch
      %127 = sbr.rel (%p125) target = $region24
    $region23: #{se_layer.1} parent=5 // pred_region
      // Predicated region
      $region25: #{se_layer.1} parent=23 // pred_check
        %p128 = pneg %p29
      $region26: #{se_layer.1} parent=23 // pred_check_branch
        %130 = sbr.rel (%p128) target = $region28
      $region27: #{se_layer.1} parent=23 // pred_region
        %p131 = scmp.lt.s32.totalorder %s9, 1
        %s132 = scalar_select %p131, %s9, 1
        %s133 = smul.addr %s132, 8
        %s134 = smul.addr %s133, 8
        %s135 = scalar_lea.vmem %s0, %s134
      $region28: #{se_layer.1} parent=23 // pred_fallthru
        _
    $region24: #{se_layer.1} parent=5 // pred_fallthru
      _
    %p136 = scmp.le.s32.totalorder 1, %s9
    %p137 = scmp.lt.s32.totalorder %s9, 3
    %p138 = pnand %p136, %p137
    %p139 = pneg %p138
    // Predicated region
    $region29: #{se_layer.1} parent=5 // pred_check
      _
    $region30: #{se_layer.1} parent=5 // pred_check_branch
      %141 = sbr.rel (%p138) target = $region32
    $region31: #{se_layer.1} parent=5 // pred_region
      %s142 = ssub.s32 %s9, 1
      %p143 = scmp.lt.s32.totalorder %s14, 1
      %s144 = scalar_select %p143, %s14, 1
      %s145 = smul.addr %s144, 8
      %s146 = smul.addr %s145, 8
      %s147 = scalar_lea.vmem %s0, %s146
      %p148 = pneg %p35
      %p149 = pneg %p32
      %p150 = pneg %p56
      %p151 = pneg %p53
      %p152 = pneg %p77
      %p153 = pneg %p74
      %p154 = pneg %p103
      %p155 = pneg %p100
      %p156 = scmp.lt.s32.totalorder %s14, 1
      %s157 = scalar_select %p156, %s14, 1
      %s158 = smul.addr %s157, 8
      %s159 = smul.addr %s158, 8
      %s160 = scalar_lea.vmem %s3, %s159
      %p161 = scmp.lt.s32.totalorder %s14, 1
      %s162 = scalar_select %p161, %s14, 1
      %s163 = smul.addr %s162, 8
      %s164 = smul.addr %s163, 8
      %s165 = scalar_lea.vmem %s0, %s164
      %p166 = scmp.lt.s32.totalorder %s14, 1
      %s167 = scalar_select %p166, %s14, 1
      %s168 = smul.addr %s167, 8
      %s169 = smul.addr %s168, 8
      %s170 = scalar_lea.vmem %s3, %s169
      %v171 = vld [vmem:[%s165] sm:$0xff]
      %v172 = vld [vmem:[%s165 + $0x8] sm:$0xff]
      %v173 = vld [vmem:[%s165 + $0x10] sm:$0xff]
      %v174 = vld [vmem:[%s165 + $0x18] sm:$0xff]
      %v175 = vld [vmem:[%s165 + $0x20] sm:$0xff]
      %v176 = vld [vmem:[%s165 + $0x28] sm:$0xff]
      %v177 = vld [vmem:[%s165 + $0x30] sm:$0xff]
      %v178 = vld [vmem:[%s165 + $0x38] sm:$0xff]
      %v179 = vld [vmem:[%s1] sm:$0xf]
      %v180 = vld [vmem:[%s2] sm:$0xff]
      %v181 = vadd.f32 %v171, %v172
      %v182 = vadd.f32 %v181, %v173
      %v183 = vadd.f32 %v182, %v174
      %v184 = vadd.f32 %v183, %v175
      %v185 = vadd.f32 %v184, %v176
      %v186 = vadd.f32 %v185, %v177
      %v187 = vadd.f32 %v186, %v178
      %188 = vadd.xlane.f32.xlu0 %v187
      %v189 = vpop.xlane.xlu0 %188
      %vm190 = vcmask 64512
      %v192 = vsel %vm190, %v179, 0
      %194 = vmatprep.subr.mxu0 0.0
      %195 = vmatpush1.msra.mxu0 %v189
      %196 = vmatprep.subr.mxu0 0.0
      %197 = vmatpush1.msra.mxu0 0.0
      %198 = vmatprep.subr.mxu0 0.0
      %199 = vmatpush1.msra.mxu0 0.0
      %200 = vmatprep.subr.mxu0 0.0
      %201 = vmatpush1.msra.mxu0 0.0
      %202 = vmatprep.subr.mxu0 0.0
      %203 = vmatpush1.msra.mxu0 0.0
      %204 = vmatprep.subr.mxu0 0.0
      %205 = vmatpush1.msra.mxu0 0.0
      %206 = vmatprep.subr.mxu0 0.0
      %207 = vmatpush1.msra.mxu0 0.0
      %208 = vmatprep.subr.mxu0 0.0
      %209 = vmatpush1.msra.mxu0 0.0
      %210 = vmatprep.subr.mxu0 0.0
      %211 = vmatpush1.msra.mxu0 0.0
      %212 = vmatprep.subr.mxu0 0.0
      %213 = vmatpush1.msra.mxu0 0.0
      %214 = vmatprep.subr.mxu0 0.0
      %215 = vmatpush1.msra.mxu0 0.0
      %216 = vmatprep.subr.mxu0 0.0
      %217 = vmatpush1.msra.mxu0 0.0
      %218 = vmatprep.subr.mxu0 0.0
      %219 = vmatpush1.msra.mxu0 0.0
      %220 = vmatprep.subr.mxu0 0.0
      %221 = vmatpush1.msra.mxu0 0.0
      %222 = vmatprep.subr.mxu0 0.0
      %223 = vmatpush1.msra.mxu0 0.0
      %224 = vmatprep.subr.mxu0 0.0
      %225 = vmatpush1.msra.mxu0 0.0
      %226 = vmatprep.subr.mxu0 0.0
      %227 = vmatpush1.msra.mxu0 0.0
      %228 = vmatprep.subr.mxu0 0.0
      %229 = vmatpush1.msra.mxu0 0.0
      %230 = vmatprep.subr.mxu0 0.0
      %231 = vmatpush1.msra.mxu0 0.0
      %232 = vmatprep.subr.mxu0 0.0
      %233 = vmatpush1.msra.mxu0 0.0
      %234 = vmatprep.subr.mxu0 0.0
      %235 = vmatpush1.msra.mxu0 0.0
      %236 = vmatprep.subr.mxu0 0.0
      %237 = vmatpush1.msra.mxu0 0.0
      %238 = vmatprep.subr.mxu0 0.0
      %239 = vmatpush1.msra.mxu0 0.0
      %240 = vmatprep.subr.mxu0 0.0
      %241 = vmatpush1.msra.mxu0 0.0
      %242 = vmatprep.subr.mxu0 0.0
      %243 = vmatpush1.msra.mxu0 0.0
      %244 = vmatprep.subr.mxu0 0.0
      %245 = vmatpush1.msra.mxu0 0.0
      %246 = vmatprep.subr.mxu0 0.0
      %247 = vmatpush1.msra.mxu0 0.0
      %248 = vmatprep.subr.mxu0 0.0
      %249 = vmatpush1.msra.mxu0 0.0
      %250 = vmatprep.subr.mxu0 0.0
      %251 = vmatpush1.msra.mxu0 0.0
      %252 = vmatprep.subr.mxu0 0.0
      %253 = vmatpush1.msra.mxu0 0.0
      %254 = vmatprep.subr.mxu0 0.0
      %255 = vmatpush1.msra.mxu0 0.0
      %256 = vmatprep.subr.mxu0 0.0
      %257 = vmatpush1.msra.mxu0 0.0
      %258 = vmatprep.mubr.f32.mxu0 0.0
      %259 = vmatmul.mubr.f32.gmra.mrb[0].mxu0 %v192
      %v260 = vpop.f32.mrb[0].mxu0
      %v261 = vadd.f32 0.0, %v260
      %v262 = vpop.f32.mrb[0].mxu0
      %263 = vdwg.mxu0
      %vm264 = vcmp.ge.f32.partialorder %v261, 0.0
      %v265 = vmul.f32 %v261, 0.01
      %v266 = vsel %vm264, %v261, %v265
      %vm267 = vcmask 31744
      %v269 = vsel %vm267, %v180, 0
      %vm271 = vcmask 1043456
      %v273 = vsel %vm271, %v266, 0
      %275 = vmatprep.subr.mxu0 0.0
      %276 = vmatpush1.msra.mxu0 %v273
      %277 = vmatprep.subr.mxu0 0.0
      %278 = vmatpush1.msra.mxu0 0.0
      %279 = vmatprep.subr.mxu0 0.0
      %280 = vmatpush1.msra.mxu0 0.0
      %281 = vmatprep.subr.mxu0 0.0
      %282 = vmatpush1.msra.mxu0 0.0
      %283 = vmatprep.subr.mxu0 0.0
      %284 = vmatpush1.msra.mxu0 0.0
      %285 = vmatprep.subr.mxu0 0.0
      %286 = vmatpush1.msra.mxu0 0.0
      %287 = vmatprep.subr.mxu0 0.0
      %288 = vmatpush1.msra.mxu0 0.0
      %289 = vmatprep.subr.mxu0 0.0
      %290 = vmatpush1.msra.mxu0 0.0
      %291 = vmatprep.subr.mxu0 0.0
      %292 = vmatpush1.msra.mxu0 0.0
      %293 = vmatprep.subr.mxu0 0.0
      %294 = vmatpush1.msra.mxu0 0.0
      %295 = vmatprep.subr.mxu0 0.0
      %296 = vmatpush1.msra.mxu0 0.0
      %297 = vmatprep.subr.mxu0 0.0
      %298 = vmatpush1.msra.mxu0 0.0
      %299 = vmatprep.subr.mxu0 0.0
      %300 = vmatpush1.msra.mxu0 0.0
      %301 = vmatprep.subr.mxu0 0.0
      %302 = vmatpush1.msra.mxu0 0.0
      %303 = vmatprep.subr.mxu0 0.0
      %304 = vmatpush1.msra.mxu0 0.0
      %305 = vmatprep.subr.mxu0 0.0
      %306 = vmatpush1.msra.mxu0 0.0
      %307 = vmatprep.subr.mxu0 0.0
      %308 = vmatpush1.msra.mxu0 0.0
      %309 = vmatprep.subr.mxu0 0.0
      %310 = vmatpush1.msra.mxu0 0.0
      %311 = vmatprep.subr.mxu0 0.0
      %312 = vmatpush1.msra.mxu0 0.0
      %313 = vmatprep.subr.mxu0 0.0
      %314 = vmatpush1.msra.mxu0 0.0
      %315 = vmatprep.subr.mxu0 0.0
      %316 = vmatpush1.msra.mxu0 0.0
      %317 = vmatprep.subr.mxu0 0.0
      %318 = vmatpush1.msra.mxu0 0.0
      %319 = vmatprep.subr.mxu0 0.0
      %320 = vmatpush1.msra.mxu0 0.0
      %321 = vmatprep.subr.mxu0 0.0
      %322 = vmatpush1.msra.mxu0 0.0
      %323 = vmatprep.subr.mxu0 0.0
      %324 = vmatpush1.msra.mxu0 0.0
      %325 = vmatprep.subr.mxu0 0.0
      %326 = vmatpush1.msra.mxu0 0.0
      %327 = vmatprep.subr.mxu0 0.0
      %328 = vmatpush1.msra.mxu0 0.0
      %329 = vmatprep.subr.mxu0 0.0
      %330 = vmatpush1.msra.mxu0 0.0
      %331 = vmatprep.subr.mxu0 0.0
      %332 = vmatpush1.msra.mxu0 0.0
      %333 = vmatprep.subr.mxu0 0.0
      %334 = vmatpush1.msra.mxu0 0.0
      %335 = vmatprep.subr.mxu0 0.0
      %336 = vmatpush1.msra.mxu0 0.0
      %337 = vmatprep.subr.mxu0 0.0
      %338 = vmatpush1.msra.mxu0 0.0
      %339 = vmatprep.mubr.f32.mxu0 0.0
      %340 = vmatmul.mubr.f32.gmra.mrb[0].mxu0 %v269
      %v341 = vpop.f32.mrb[0].mxu0
      %v342 = vadd.f32 0.0, %v341
      %v343 = vpop.f32.mrb[0].mxu0
      %344 = vdwg.mxu0
      %v345 = vxor.u32 %v342, 2147483648
      %v346 = vmul.f32 %v345, 1.442695
      %v347 = vpow.pop %v346
      %v348 = vadd.f32 %v347, 1.0
      %v349 = vrcp.pop %v348
      %v350 = vmul.f32 1.0, %v349
      %352 = vset.pattern.permute.xlu0 0
      %353 = vperm.xlu0 %352, %v350
      %v354 = vpop.permute.xlu0 %353
      %v356 = vmul.f32 %v171, %v354
      %v357 = vmul.f32 %v172, %v354
      %v358 = vmul.f32 %v173, %v354
      %v359 = vmul.f32 %v174, %v354
      %v360 = vmul.f32 %v175, %v354
      %v361 = vmul.f32 %v176, %v354
      %v362 = vmul.f32 %v177, %v354
      %v363 = vmul.f32 %v178, %v354
      %364 = vst [vmem:[%s170] sm:$0xff] %v356
      %365 = vst [vmem:[%s170 + $0x8] sm:$0xff] %v357
      %366 = vst [vmem:[%s170 + $0x10] sm:$0xff] %v358
      %367 = vst [vmem:[%s170 + $0x18] sm:$0xff] %v359
      %368 = vst [vmem:[%s170 + $0x20] sm:$0xff] %v360
      %369 = vst [vmem:[%s170 + $0x28] sm:$0xff] %v361
      %370 = vst [vmem:[%s170 + $0x30] sm:$0xff] %v362
      %371 = vst [vmem:[%s170 + $0x38] sm:$0xff] %v363
      %p372 = scmp.lt.s32.totalorder %s14, 1
      %s373 = scalar_select %p372, %s14, 1
      %s374 = smul.addr %s373, 8
      %s375 = smul.addr %s374, 8
      %s376 = scalar_lea.vmem %s3, %s375
      // Predicated region
      $region33: #{se_layer.1} parent=31 // pred_check
        %p377 = pneg %p100
      $region34: #{se_layer.1} parent=31 // pred_check_branch
        %379 = sbr.rel (%p377) target = $region36
      $region35: #{se_layer.1} parent=31 // pred_region
        _
      $region36: #{se_layer.1} parent=31 // pred_fallthru
        _
    $region32: #{se_layer.1} parent=5 // pred_fallthru
      _
    %p380 = scmp.le.s32.totalorder 2, %s9
    // Predicated region
    $region37: #{se_layer.1} parent=5 // pred_check
      %p381 = pneg %p380
    $region38: #{se_layer.1} parent=5 // pred_check_branch
      %383 = sbr.rel (%p381) target = $region40
    $region39: #{se_layer.1} parent=5 // pred_region
      %s384 = ssub.s32 %s9, 2
      // Predicated region
      $region41: #{se_layer.1} parent=39 // pred_check
        %p385 = pneg %p106
      $region42: #{se_layer.1} parent=39 // pred_check_branch
        %387 = sbr.rel (%p385) target = $region44
      $region43: #{se_layer.1} parent=39 // pred_region
        %p388 = scmp.lt.s32.totalorder %s15, 1
        %s389 = scalar_select %p388, %s15, 1
        %s390 = smul.addr %s389, 8
        %s391 = smul.addr %s390, 8
        %s392 = scalar_lea.vmem %s3, %s391
      $region44: #{se_layer.1} parent=39 // pred_fallthru
        _
    $region40: #{se_layer.1} parent=5 // pred_fallthru
      _
  $region6: #{se_layer.1} parent=0 // loop_footer
    %s13 = sadd.s32 1, %s9
  $region7: #{se_layer.1} parent=0 // loop_footer_branch
    %8 = sbr.rel target = $region3
  $region8: #{se_layer.1} parent=0 // loop_exit
    _

</llo_original>
